<compile_context>
chip_gen: v6e
topology: v6e:2x2x1
jax: 0.10.0
libtpu: 0.0.40
codegen_flags: <defaults>
</compile_context>

<pallas_src>
import functools

import jax
import jax.numpy as jnp
from jax.experimental import pallas as pl
from jax.experimental.pallas import tpu as pltpu


def _round_up(x, m):
    return (x + m - 1) // m * m


def _cdiv(a, b):
    return (a + b - 1) // b


def _glu_mlp_kernel(x_ref, w_in_ref, w_out_ref, o_ref, acc_ref):
    """One (token-tile, H-tile) grid step of the SwiGLU MLP."""
    h = pl.program_id(1)
    th = w_out_ref.shape[0]

    @pl.when(h == 0)
    def _():
        acc_ref[...] = jnp.zeros_like(acc_ref)

    # If the caller already feeds bf16 activations this cast is a no-op.
    x = x_ref[...].astype(w_in_ref.dtype)

    # Fused gate/up projection for this H block: one long-N MXU pass, f32 acc.
    y = jnp.dot(x, w_in_ref[...], preferred_element_type=jnp.float32)  # (tm, 2*th)
    gate = y[:, :th]      # static, lane-aligned split (th % 128 == 0)
    up = y[:, th:]
    hcur = (jax.nn.silu(gate) * up).astype(w_out_ref.dtype)           # bf16

    # Partial down projection for this H block, accumulated in f32.
    acc_ref[...] += jnp.dot(hcur, w_out_ref[...],
                            preferred_element_type=jnp.float32)

    @pl.when(h == pl.num_programs(1) - 1)
    def _():
        o_ref[...] = acc_ref[...].astype(o_ref.dtype)   # lane-dense (D) store


def prepare_granite_mlp_weights(w_input, w_output, compute_dtype=jnp.bfloat16,
                                h_tile=None,
                                weight_vmem_budget=24 * 1024 * 1024):
    """One-time weight prep (param-init time, NOT in the hot path).

    w_input : (2H, D) = input_linear.weight
    w_output: (D, H)  = output_linear.weight

    Returns (w_in_packed (D, 2H), w_out_t (H, D), h_tile).  Gate/up columns are
    block-interleaved into contiguous [gate_j | up_j] slabs of width 2*h_tile
    so each H-grid step fetches ONE contiguous lane-aligned weight block and
    the in-kernel gate/up split stays a free static slice.
    """
    w_input = jnp.asarray(w_input)
    w_output = jnp.asarray(w_output)
    two_h, D = w_input.shape
    H = two_h // 2
    assert two_h == 2 * H and w_output.shape == (D, H)
    # TODO(synk): pad D/H to multiples of 128 instead of asserting.
    assert D % 128 == 0, "hidden_size must be a multiple of 128 (lane tile)"
    assert H % 128 == 0, "shared_intermediate_size must be a multiple of 128"

    wbytes = jnp.dtype(compute_dtype).itemsize
    if h_tile is None:
        if 3 * D * H * wbytes <= weight_vmem_budget:
            # Weights fit fully resident (single-buffered): one H step.
            h_tile = H
        else:
            # Stream double-buffered blocks: 2 * 3 * D * th * wbytes <= budget.
            h_tile = (weight_vmem_budget // (6 * D * wbytes)) // 128 * 128
            h_tile = int(min(max(h_tile, 128), H))
            while H % h_tile != 0:     # keep H evenly tiled, lane-aligned
                h_tile -= 128
    assert h_tile % 128 == 0 and H % h_tile == 0

    w_in_t = w_input.T.astype(compute_dtype)              # (D, 2H) = [gate|up]
    gate = w_in_t[:, :H].reshape(D, H // h_tile, h_tile)
    up = w_in_t[:, H:].reshape(D, H // h_tile, h_tile)
    w_in_packed = jnp.concatenate([gate, up], axis=-1).reshape(D, 2 * H)
    w_out_t = w_output.T.astype(compute_dtype)             # (H, D)
    return w_in_packed, w_out_t, int(h_tile)


@functools.partial(jax.jit, static_argnames=("h_tile", "tm"))
def granite_moe_shared_mlp(hidden_states, w_in_packed, w_out_t, *, h_tile,
                           tm=None):
    """
    hidden_states: (B, S, D)       (pass bf16 activations if the model is bf16)
    w_in_packed:   (D, 2H) bf16, gate/up block-interleaved with tile `h_tile`
    w_out_t:       (H, D)  bf16
    returns:       (B, S, D) in hidden_states.dtype
    """
    B, S, D = hidden_states.shape
    D_in, two_h = w_in_packed.shape
    H, D_out = w_out_t.shape
    assert D_in == D and D_out == D and two_h == 2 * H
    assert H % h_tile == 0 and h_tile % 128 == 0 and D % 128 == 0
    th = h_tile
    nH = H // th

    M = B * S
    x2d = hidden_states.reshape(M, D)
    x_bytes = jnp.dtype(x2d.dtype).itemsize
    w_bytes = jnp.dtype(w_in_packed.dtype).itemsize
    out_bytes = jnp.dtype(hidden_states.dtype).itemsize

    # Physical VMEM per core (v5e/v6e: 128 MiB, v7x: 64 MiB).
    try:
        vmem_cap = int(pltpu.get_tpu_info().vmem_capacity_bytes)
    except Exception:
        vmem_cap = 64 * 1024 * 1024   # conservative fallback (v7x per-core)

    # Token-tile selection.
    if tm is None:
        if nH == 1:
            tm = 256                  # weights resident -> modest token tiles
        else:
            # Streaming weights: arithmetic intensity ~ tm flops/byte.
            # v7x roofline ~310 flops/byte (smaller VMEM), v6e ~680.
            tm = 512 if vmem_cap <= 64 * 1024 * 1024 else 1024
    tm_eff = max(8, min(tm, _round_up(M, 8)))
    # Keep >=2 steps along the "parallel" M axis so v7x can megacore-shard.
    if M > 8 and _round_up(M, tm_eff) // tm_eff < 2:
        tm_eff = _round_up(_cdiv(M, 2), 8)
    Mp = _round_up(M, tm_eff)
    if Mp != M:
        x2d = jnp.pad(x2d, ((0, Mp - M), (0, 0)))   # silu(0)*0 == 0 -> benign
    grid = (Mp // tm_eff, nH)

    # VMEM estimate, including the f32 intermediates the compiler materializes.
    w_bufs = 1 if nH == 1 else 2                    # Buffered(1) when resident
    vmem_est = (
        2 * tm_eff * D * x_bytes                    # x tile (double-buffered)
        + w_bufs * 3 * D * th * w_bytes             # W_in (D,2th) + W_out (th,D)
        + 2 * tm_eff * D * out_bytes                # out tile (double-buffered)
        + tm_eff * D * 4                            # f32 accumulator scratch
        + tm_eff * 2 * th * 4                       # y = x @ W_in block (f32)
        + tm_eff * th * w_bytes                     # silu(gate)*up (bf16)
    )
    # Always set a scoped limit (v5e default is only 16 MiB); cap below the
    # physical per-core VMEM with ~8 MiB headroom (v7x-safe).
    vmem_limit = int(min(vmem_est + (4 << 20), vmem_cap - (8 << 20)))
    vmem_limit = max(vmem_limit, 16 << 20)

    # Constant index_map for resident weights -> single-buffer them.
    weight_mode = {} if nH > 1 else {"pipeline_mode": pl.Buffered(1)}

    out2d = pl.pallas_call(
        _glu_mlp_kernel,
        out_shape=jax.ShapeDtypeStruct((Mp, D), hidden_states.dtype),
        grid_spec=pltpu.PrefetchScalarGridSpec(
            num_scalar_prefetch=0,
            grid=grid,
            in_specs=[
                # Token tile; constant along h, so re-fetched only when i moves.
                pl.BlockSpec((tm_eff, D), lambda i, h: (i, 0)),
                # Packed gate/up weight block ([gate_h | up_h], contiguous).
                pl.BlockSpec((D, 2 * th), lambda i, h: (0, h), **weight_mode),
                # Down-projection weight block.
                pl.BlockSpec((th, D), lambda i, h: (h, 0), **weight_mode),
            ],
            out_specs=pl.BlockSpec((tm_eff, D), lambda i, h: (i, 0)),
            scratch_shapes=[pltpu.VMEM((tm_eff, D), jnp.float32)],
        ),
        compiler_params=pltpu.CompilerParams(
            dimension_semantics=("parallel", "arbitrary"),
            vmem_limit_bytes=vmem_limit,
        ),
    )(x2d, w_in_packed, w_out_t)

    if Mp != M:
        out2d = out2d[:M]
    return out2d.reshape(B, S, D)


def _reference(hidden_states, w_input, w_output):
    y = hidden_states @ w_input.T
    H = w_input.shape[0] // 2
    g, u = y[..., :H], y[..., H:]
    return (jax.nn.silu(g) * u) @ w_output.T


if __name__ == "__main__":
    # Small, lane-aligned config: hidden_size=128, shared_intermediate_size=256.
    B, S, D, H = 2, 8, 128, 256

    key = jax.random.PRNGKey(0)
    k_x, k_wi, k_wo = jax.random.split(key, 3)

    hidden_states = jax.random.normal(k_x, (B, S, D), dtype=jnp.float32)
    w_input = jax.random.normal(k_wi, (2 * H, D), dtype=jnp.float32) * 0.05
    w_output = jax.random.normal(k_wo, (D, H), dtype=jnp.float32) * 0.05

    ref = _reference(hidden_states, w_input, w_output)

    # --- Path 1: weights fully resident (single H step, Buffered(1)). ---
    w_in_p, w_out_t, h_tile = prepare_granite_mlp_weights(w_input, w_output)
    out = granite_moe_shared_mlp(hidden_states, w_in_p, w_out_t, h_tile=h_tile)
    out = jax.block_until_ready(out)
    assert out.shape == (B, S, D)
    err = jnp.max(jnp.abs(out - ref))
    # bf16 MXU operands with f32 accumulation -> loosened tolerance vs f32 ref.
    assert jnp.allclose(out, ref, atol=1e-2, rtol=1e-2), (
        f"resident path mismatch, max abs err = {err}")

    # --- Path 2: force H-tiled weight streaming (exercises the accumulator). ---
    w_in_p2, w_out_t2, h_tile2 = prepare_granite_mlp_weights(
        w_input, w_output, h_tile=128)
    out2 = granite_moe_shared_mlp(hidden_states, w_in_p2, w_out_t2,
                                  h_tile=h_tile2)
    out2 = jax.block_until_ready(out2)
    err2 = jnp.max(jnp.abs(out2 - ref))
    assert jnp.allclose(out2, ref, atol=1e-2, rtol=1e-2), (
        f"streaming path mismatch, max abs err = {err2}")

    print("KERNEL_OK")
</pallas_src>

<mosaic_0001>
module attributes {stable_mosaic.version = 11 : i64} {
  func.func @_glu_mlp_kernel(%arg0: i32, %arg1: i32, %arg2: memref<8x128xf32, #tpu.memory_space<vmem>>, %arg3: memref<128x512xbf16, #tpu.memory_space<vmem>>, %arg4: memref<256x128xbf16, #tpu.memory_space<vmem>>, %arg5: memref<8x128xf32, #tpu.memory_space<vmem>>, %arg6: memref<8x128xf32, #tpu.memory_space<vmem>>) attributes {dimension_semantics = [#tpu.dimension_semantics<parallel>, #tpu.dimension_semantics<arbitrary>], iteration_bounds = array<i64: 2, 1>, scalar_prefetch = 0 : i64, scratch_operands = 1 : i64, tpu.core_type = #tpu.core_type<tc>, window_params = [{transform_indices = @transform_0, window_bounds = array<i64: 8, 128>}, {pipeline_mode = #tpu.pipeline_mode<synchronous>, transform_indices = @transform_1, window_bounds = array<i64: 128, 512>}, {pipeline_mode = #tpu.pipeline_mode<synchronous>, transform_indices = @transform_2, window_bounds = array<i64: 256, 128>}, {transform_indices = @transform_3, window_bounds = array<i64: 8, 128>}]} {
    %c0_i32 = arith.constant 0 : i32
    %0 = arith.cmpi eq, %arg1, %c0_i32 : i32
    %1 = arith.extui %0 : i1 to i32
    %c0_i32_0 = arith.constant 0 : i32
    %2 = arith.cmpi ne, %1, %c0_i32_0 : i32
    scf.if %2 {
      %cst_14 = arith.constant 0.000000e+00 : f32
      %25 = vector.broadcast %cst_14 : f32 to vector<8x128xf32>
      %c0_15 = arith.constant 0 : index
      %c0_16 = arith.constant 0 : index
      %26 = vector.load %arg6[%c0_15, %c0_16] : memref<8x128xf32, #tpu.memory_space<vmem>>, vector<8x128xf32>
      tpu.vector_store %arg6[%c0_15, %c0_16], %25 {strides = array<i32>} : memref<8x128xf32, #tpu.memory_space<vmem>>, vector<8x128xf32>,
    } else {
    }
    %c0 = arith.constant 0 : index
    %c0_1 = arith.constant 0 : index
    %3 = vector.load %arg2[%c0, %c0_1] : memref<8x128xf32, #tpu.memory_space<vmem>>, vector<8x128xf32>
    %4 = arith.truncf %3 : vector<8x128xf32> to vector<8x128xbf16>
    %c0_2 = arith.constant 0 : index
    %c0_3 = arith.constant 0 : index
    %5 = vector.load %arg3[%c0_2, %c0_3] : memref<128x512xbf16, #tpu.memory_space<vmem>>, vector<128x512xbf16>
    %cst = arith.constant dense<0.000000e+00> : vector<8x512xf32>
    %6 = tpu.matmul %4, %5, %cst {dimension_numbers = #tpu.dot_dimension_numbers<[1], [0], [0], [1], [0, 0, 1, 1], [], []>} : vector<8x128xbf16>, vector<128x512xbf16>, vector<8x512xf32> -> vector<8x512xf32>
    %7 = vector.extract_strided_slice %6 {offsets = [0, 0], sizes = [8, 256], strides = [1, 1]} : vector<8x512xf32> to vector<8x256xf32>
    %8 = vector.extract_strided_slice %6 {offsets = [0, 256], sizes = [8, 256], strides = [1, 1]} : vector<8x512xf32> to vector<8x256xf32>
    %9 = arith.negf %7 : vector<8x256xf32>
    %10 = math.exp %9 : vector<8x256xf32>
    %cst_4 = arith.constant 1.000000e+00 : f32
    %11 = vector.broadcast %cst_4 : f32 to vector<8x256xf32>
    %12 = arith.addf %11, %10 : vector<8x256xf32>
    %13 = arith.divf %11, %12 : vector<8x256xf32>
    %14 = arith.mulf %7, %13 : vector<8x256xf32>
    %15 = arith.mulf %14, %8 : vector<8x256xf32>
    %16 = arith.truncf %15 : vector<8x256xf32> to vector<8x256xbf16>
    %c0_5 = arith.constant 0 : index
    %c0_6 = arith.constant 0 : index
    %17 = vector.load %arg6[%c0_5, %c0_6] : memref<8x128xf32, #tpu.memory_space<vmem>>, vector<8x128xf32>
    %c0_7 = arith.constant 0 : index
    %c0_8 = arith.constant 0 : index
    %18 = vector.load %arg4[%c0_7, %c0_8] : memref<256x128xbf16, #tpu.memory_space<vmem>>, vector<256x128xbf16>
    %cst_9 = arith.constant dense<0.000000e+00> : vector<8x128xf32>
    %19 = tpu.matmul %16, %18, %cst_9 {dimension_numbers = #tpu.dot_dimension_numbers<[1], [0], [0], [1], [0, 0, 1, 1], [], []>} : vector<8x256xbf16>, vector<256x128xbf16>, vector<8x128xf32> -> vector<8x128xf32>
    %20 = arith.addf %17, %19 : vector<8x128xf32>
    %c0_10 = arith.constant 0 : index
    %c0_11 = arith.constant 0 : index
    %21 = vector.load %arg6[%c0_10, %c0_11] : memref<8x128xf32, #tpu.memory_space<vmem>>, vector<8x128xf32>
    tpu.vector_store %arg6[%c0_10, %c0_11], %20 {strides = array<i32>} : memref<8x128xf32, #tpu.memory_space<vmem>>, vector<8x128xf32>,
    %c0_i32_12 = arith.constant 0 : i32
    %22 = arith.cmpi eq, %arg1, %c0_i32_12 : i32
    %23 = arith.extui %22 : i1 to i32
    %c0_i32_13 = arith.constant 0 : i32
    %24 = arith.cmpi ne, %23, %c0_i32_13 : i32
    scf.if %24 {
      %c0_14 = arith.constant 0 : index
      %c0_15 = arith.constant 0 : index
      %25 = vector.load %arg6[%c0_14, %c0_15] : memref<8x128xf32, #tpu.memory_space<vmem>>, vector<8x128xf32>
      %c0_16 = arith.constant 0 : index
      %c0_17 = arith.constant 0 : index
      %26 = vector.load %arg5[%c0_16, %c0_17] : memref<8x128xf32, #tpu.memory_space<vmem>>, vector<8x128xf32>
      tpu.vector_store %arg5[%c0_16, %c0_17], %25 {strides = array<i32>} : memref<8x128xf32, #tpu.memory_space<vmem>>, vector<8x128xf32>,
    } else {
    }
    return
  }
  func.func @transform_0(%arg0: i32, %arg1: i32) -> (i32, i32) {
    %c0_i32 = arith.constant 0 : i32
    %c0_i32_0 = arith.constant 0 : i32
    return %arg0, %c0_i32 : i32, i32
  }
  func.func @transform_1(%arg0: i32, %arg1: i32) -> (i32, i32) {
    %c0_i32 = arith.constant 0 : i32
    %c0_i32_0 = arith.constant 0 : i32
    return %c0_i32, %arg1 : i32, i32
  }
  func.func @transform_2(%arg0: i32, %arg1: i32) -> (i32, i32) {
    %c0_i32 = arith.constant 0 : i32
    %c0_i32_0 = arith.constant 0 : i32
    return %arg1, %c0_i32 : i32, i32
  }
  func.func @transform_3(%arg0: i32, %arg1: i32) -> (i32, i32) {
    %c0_i32 = arith.constant 0 : i32
    %c0_i32_0 = arith.constant 0 : i32
    return %arg0, %c0_i32 : i32, i32
  }
}

</mosaic_0001>

<llo_original>
// kernel: granite_moe_shared_mlp.1
$region0: #{granite_moe_shared_mlp.1}
  #allocation0 [shape = 'u32[]', space=smem, size = 0x4, offset = 0x4, fixed_abs, tag = 'smem constant byte address 0x4 - core index']
  #allocation1 [shape = 'u32[144,128]{1,0:T(1,128)}', space=vmem, size = 0x12000, scoped, tag = 'internal scratch']
  #allocation2 [shape = 'f32[8,128]{1,0:T(8,128)}', space=vmem, size = 0x1000, scoped, tag = 'scratch operand']
  %s0 = inlined_call_operand.hbm [shape: f32[16,128], index: 0, kind: input, shape index: {}]
  %s1 = inlined_call_operand.hbm [shape: bf16[128,512], index: 1, kind: input, shape index: {}]
  %s2 = inlined_call_operand.hbm [shape: bf16[256,128], index: 2, kind: input, shape index: {}]
  %s3 = inlined_call_operand.hbm [shape: f32[16,128], index: 3, kind: output, shape index: {}]
  %s4 = sld [smem:[#allocation0]]
  $region65: #{granite_moe_shared_mlp.1} parent=0
    _
  %s6 = ssub.s32 1, %s4
  %s7 = scalar_select 0, %s6, %s4
  $region1: #{granite_moe_shared_mlp.1} parent=0
    #allocation3 [shape = 'u8[8192]{0}', space=vmem, size = 0x2000, scoped, tag = 'input window, operand 0']
    #allocation4 [shape = 's32[2]{0}', space=sflag, size = 0x8, scoped, tag = 'scoped memory for granite_moe_shared_mlp.1']
    #allocation5 [shape = 's32[2]{0}', space=sflag, size = 0x8, scoped, tag = 'scoped memory for granite_moe_shared_mlp.1']
    #allocation6 [shape = 'u8[131072]{0}', space=vmem, size = 0x20000, scoped, tag = 'input window, operand 1, single buffered']
    #allocation7 [shape = 's32[1]{0}', space=sflag, size = 0x4, scoped, tag = 'scoped memory for granite_moe_shared_mlp.1']
    #allocation8 [shape = 'u8[65536]{0}', space=vmem, size = 0x10000, scoped, tag = 'input window, operand 2, single buffered']
    #allocation9 [shape = 'u8[8192]{0}', space=vmem, size = 0x2000, scoped, tag = 'output window, operand 0']
    %8 = vsyncpa [#allocation4], 0
    %s9 = scalar_lea.sflag [#allocation4], 1
    %10 = vsyncpa %s9, 0
    %11 = vsyncpa [#allocation7], 0
    %12 = vsyncpa [#allocation5], 0
    %s13 = scalar_lea.sflag [#allocation5], 1
    %14 = vsyncpa %s13, 0
    loop: start=0, step=1, limit=4
    $region2: #{granite_moe_shared_mlp.1} parent=1 // loop_pre_header
      _
    $region3: #{granite_moe_shared_mlp.1} parent=1 // loop_header
      %s16 = sphi 0, %s20
      %p17 = scmp.ge.s32.totalorder %s16, 4
      %s23 = sphi 0, %s35
      %s24 = sphi 0, %s31
      %s25 = sphi 0, %s23
      %s26 = sphi 0, %s24
      %s27 = sphi 0, %s25
      %s28 = sphi 0, %s26
      %s38 = sphi 0, %s40
      %s41 = sphi 0, %s38
      %s42 = sphi 0, %s41
      %s58 = sphi 0, %s42
      %s64 = sphi 0, %s66
      %s67 = sphi 0, %s64
      %s68 = sphi 0, %s67
      %s84 = sphi 0, %s68
      %s90 = sphi 0, %s92
      %s93 = sphi 0, %s90
      %s94 = sphi 0, %s93
      %s110 = sphi 0, %s94
      %s116 = sphi 0, %s118
      %s119 = sphi 0, %s116
      %s120 = sphi 0, %s119
      %s136 = sphi 0, %s120
    $region4: #{granite_moe_shared_mlp.1} parent=1 // loop_header_branch
      %19 = sbr.rel (%p17) target = $region8
    $region5: #{granite_moe_shared_mlp.1} parent=1 // loop_body
      %s21 = ssub.s32 %s16, 1
      %s22 = ssub.s32 %s16, 2
      %s29 = sadd.s32 1, %s24
      %p30 = scmp.ge.s32.totalorder %s29, 1
      %s31 = scalar_select %p30, 0, %s29
      %s32 = sadd.s32 1, %s23
      %s33 = scalar_select %p30, %s32, %s23
      %p34 = scmp.ge.s32.totalorder %s33, 2
      %s35 = scalar_select %p34, 0, %s33
      %s36 = ssub.s32 %s23, %s35
      %p37 = scmp.eq.s32.totalorder %s36, 0
      %s39 = sadd.s32 %s38, 1
      %s40 = scalar_select %p37, %s38, %s39
      %p43 = pneg %p37
      %p44 = scmp.eq.s32.totalorder %s16, 1
      %p45 = por %p43, %p44
      %p46 = scmp.ne.s32.totalorder %s38, %s41
      %p47 = scmp.eq.s32.totalorder %s16, 0
      %p48 = por %p46, %p47
      %p49 = scmp.ne.s32.totalorder %s38, %s41
      %p50 = scmp.eq.s32.totalorder %s21, 1
      %p51 = por %p49, %p50
      %p52 = scmp.ne.s32.totalorder %s41, %s42
      %p53 = scmp.eq.s32.totalorder %s21, 0
      %p54 = por %p52, %p53
      %p55 = scmp.ne.s32.totalorder %s41, %s42
      %p56 = scmp.eq.s32.totalorder %s22, 1
      %p57 = por %p55, %p56
      %p59 = scmp.ne.s32.totalorder %s42, %s58
      %p60 = scmp.eq.s32.totalorder %s22, 0
      %p61 = por %p59, %p60
      %s62 = ssub.s32 %s24, %s31
      %p63 = scmp.eq.s32.totalorder %s62, 0
      %s65 = sadd.s32 %s64, 1
      %s66 = scalar_select %p63, %s64, %s65
      %p69 = pneg %p63
      %p70 = scmp.eq.s32.totalorder %s16, 1
      %p71 = por %p69, %p70
      %p72 = scmp.ne.s32.totalorder %s64, %s67
      %p73 = scmp.eq.s32.totalorder %s16, 0
      %p74 = por %p72, %p73
      %p75 = scmp.ne.s32.totalorder %s64, %s67
      %p76 = scmp.eq.s32.totalorder %s21, 1
      %p77 = por %p75, %p76
      %p78 = scmp.ne.s32.totalorder %s67, %s68
      %p79 = scmp.eq.s32.totalorder %s21, 0
      %p80 = por %p78, %p79
      %p81 = scmp.ne.s32.totalorder %s67, %s68
      %p82 = scmp.eq.s32.totalorder %s22, 1
      %p83 = por %p81, %p82
      %p85 = scmp.ne.s32.totalorder %s68, %s84
      %p86 = scmp.eq.s32.totalorder %s22, 0
      %p87 = por %p85, %p86
      %s88 = ssub.s32 %s24, %s31
      %p89 = scmp.eq.s32.totalorder %s88, 0
      %s91 = sadd.s32 %s90, 1
      %s92 = scalar_select %p89, %s90, %s91
      %p95 = pneg %p89
      %p96 = scmp.eq.s32.totalorder %s16, 1
      %p97 = por %p95, %p96
      %p98 = scmp.ne.s32.totalorder %s90, %s93
      %p99 = scmp.eq.s32.totalorder %s16, 0
      %p100 = por %p98, %p99
      %p101 = scmp.ne.s32.totalorder %s90, %s93
      %p102 = scmp.eq.s32.totalorder %s21, 1
      %p103 = por %p101, %p102
      %p104 = scmp.ne.s32.totalorder %s93, %s94
      %p105 = scmp.eq.s32.totalorder %s21, 0
      %p106 = por %p104, %p105
      %p107 = scmp.ne.s32.totalorder %s93, %s94
      %p108 = scmp.eq.s32.totalorder %s22, 1
      %p109 = por %p107, %p108
      %p111 = scmp.ne.s32.totalorder %s94, %s110
      %p112 = scmp.eq.s32.totalorder %s22, 0
      %p113 = por %p111, %p112
      %s114 = ssub.s32 %s23, %s35
      %p115 = scmp.eq.s32.totalorder %s114, 0
      %s117 = sadd.s32 %s116, 1
      %s118 = scalar_select %p115, %s116, %s117
      %p121 = pneg %p115
      %p122 = scmp.eq.s32.totalorder %s16, 1
      %p123 = por %p121, %p122
      %p124 = scmp.ne.s32.totalorder %s116, %s119
      %p125 = scmp.eq.s32.totalorder %s16, 0
      %p126 = por %p124, %p125
      %p127 = scmp.ne.s32.totalorder %s116, %s119
      %p128 = scmp.eq.s32.totalorder %s21, 1
      %p129 = por %p127, %p128
      %p130 = scmp.ne.s32.totalorder %s119, %s120
      %p131 = scmp.eq.s32.totalorder %s21, 0
      %p132 = por %p130, %p131
      %p133 = scmp.ne.s32.totalorder %s119, %s120
      %p134 = scmp.eq.s32.totalorder %s22, 1
      %p135 = por %p133, %p134
      %p137 = scmp.ne.s32.totalorder %s120, %s136
      %p138 = scmp.eq.s32.totalorder %s22, 0
      %p139 = por %p137, %p138
      %p140 = scmp.le.s32.totalorder 1, %s16
      %p141 = scmp.lt.s32.totalorder %s16, 3
      %p142 = pnand %p140, %p141
      %p143 = pneg %p142
      // Predicated region
      $region9: #{granite_moe_shared_mlp.1} parent=5 // pred_check
        _
      $region10: #{granite_moe_shared_mlp.1} parent=5 // pred_check_branch
        %145 = sbr.rel (%p142) target = $region12
      $region11: #{granite_moe_shared_mlp.1} parent=5 // pred_region
        %s146 = ssub.s32 %s16, 1
        // Predicated region
        $region13: #{granite_moe_shared_mlp.1} parent=11 // pred_check
          %p147 = pneg %p80
        $region14: #{granite_moe_shared_mlp.1} parent=11 // pred_check_branch
          %149 = sbr.rel (%p147) target = $region16
        $region15: #{granite_moe_shared_mlp.1} parent=11 // pred_region
          %s150 = smul.u32 4, %s26
          %s152 = ssub.s32 4096, 4096
          %153 = vsyncadd [#allocation7], %s152
          %s154 = smul.addr %s150, 64
          %s155 = scalar_lea.hbm %s1, %s154
          %s156 = sshll.u32 [#allocation6], 4
          %s157 = int_to_ptr.vmem [resolvable:$true] %s156
          %162 = dma.hbm_to_vmem [thread:$0]  %s155, 4096, %s157, [#allocation7], 256, 256, 16
        $region16: #{granite_moe_shared_mlp.1} parent=11 // pred_fallthru
          _
        // Predicated region
        $region17: #{granite_moe_shared_mlp.1} parent=11 // pred_check
          %p163 = pneg %p106
        $region18: #{granite_moe_shared_mlp.1} parent=11 // pred_check_branch
          %165 = sbr.rel (%p163) target = $region20
        $region19: #{granite_moe_shared_mlp.1} parent=11 // pred_region
          %s166 = smul.u32 32, %s26
          %s168 = ssub.s32 2048, 2048
          %169 = vsyncadd [#allocation7], %s168
          %s170 = smul.addr %s166, 64
          %s171 = scalar_lea.hbm %s2, %s170
          %s172 = sshll.u32 [#allocation8], 4
          %s173 = int_to_ptr.vmem [resolvable:$true] %s172
          %178 = dma.hbm_to_vmem [thread:$0]  %s171, 2048, %s173, [#allocation7], 64, 64, 4
        $region20: #{granite_moe_shared_mlp.1} parent=11 // pred_fallthru
          _
      $region12: #{granite_moe_shared_mlp.1} parent=5 // pred_fallthru
        _
      %p179 = scmp.lt.s32.totalorder %s16, 2
      // Predicated region
      $region21: #{granite_moe_shared_mlp.1} parent=5 // pred_check
        %p180 = pneg %p179
      $region22: #{granite_moe_shared_mlp.1} parent=5 // pred_check_branch
        %182 = sbr.rel (%p180) target = $region24
      $region23: #{granite_moe_shared_mlp.1} parent=5 // pred_region
        // Predicated region
        $region25: #{granite_moe_shared_mlp.1} parent=23 // pred_check
          %p183 = pneg %p48
        $region26: #{granite_moe_shared_mlp.1} parent=23 // pred_check_branch
          %185 = sbr.rel (%p183) target = $region28
        $region27: #{granite_moe_shared_mlp.1} parent=23 // pred_region
          %s186 = sand.u32 %s38, 1
          %s187 = scalar_lea.sflag [#allocation4], %s186
          %s188 = sand.u32 %s38, 1
          %s189 = smul.addr %s188, 8
          %s190 = scalar_lea.vmem [#allocation3], %s189
          %s192 = ssub.s32 128, 128
          %193 = vsyncadd %s187, %s192
          %s194 = smul.addr %s23, 128
          %s195 = scalar_lea.hbm %s0, %s194
          %s197 = sshll.u32 %s190, 4
          %s198 = int_to_ptr.vmem [resolvable:$true] %s197
          %200 = dma.hbm_to_vmem [thread:$0]  %s195, 128, %s198, %s187
        $region28: #{granite_moe_shared_mlp.1} parent=23 // pred_fallthru
          _
      $region24: #{granite_moe_shared_mlp.1} parent=5 // pred_fallthru
        _
      %p201 = scmp.le.s32.totalorder 1, %s16
      %p202 = scmp.lt.s32.totalorder %s16, 3
      %p203 = pnand %p201, %p202
      %p204 = pneg %p203
      // Predicated region
      $region29: #{granite_moe_shared_mlp.1} parent=5 // pred_check
        _
      $region30: #{granite_moe_shared_mlp.1} parent=5 // pred_check_branch
        %206 = sbr.rel (%p203) target = $region32
      $region31: #{granite_moe_shared_mlp.1} parent=5 // pred_region
        %s207 = ssub.s32 %s16, 1
        %s208 = sand.u32 %s41, 1
        %s209 = scalar_lea.sflag [#allocation4], %s208
        %s210 = sand.u32 %s41, 1
        %s211 = smul.addr %s210, 8
        %s212 = scalar_lea.vmem [#allocation3], %s211
        // Predicated region
        $region33: #{granite_moe_shared_mlp.1} parent=31 // pred_check
          %p213 = pneg %p54
        $region34: #{granite_moe_shared_mlp.1} parent=31 // pred_check_branch
          %215 = sbr.rel (%p213) target = $region36
        $region35: #{granite_moe_shared_mlp.1} parent=31 // pred_region
          %216 = dma.done %s209, 128
        $region36: #{granite_moe_shared_mlp.1} parent=31 // pred_fallthru
          _
        // Predicated region
        $region37: #{granite_moe_shared_mlp.1} parent=31 // pred_check
          %p217 = pneg %p80
        $region38: #{granite_moe_shared_mlp.1} parent=31 // pred_check_branch
          %219 = sbr.rel (%p217) target = $region40
        $region39: #{granite_moe_shared_mlp.1} parent=31 // pred_region
          %220 = dma.done [#allocation7], 4096
        $region40: #{granite_moe_shared_mlp.1} parent=31 // pred_fallthru
          _
        // Predicated region
        $region41: #{granite_moe_shared_mlp.1} parent=31 // pred_check
          %p221 = pneg %p106
        $region42: #{granite_moe_shared_mlp.1} parent=31 // pred_check_branch
          %223 = sbr.rel (%p221) target = $region44
        $region43: #{granite_moe_shared_mlp.1} parent=31 // pred_region
          %224 = dma.done [#allocation7], 2048
        $region44: #{granite_moe_shared_mlp.1} parent=31 // pred_fallthru
          _
        %s225 = sand.u32 %s41, 1
        %s226 = scalar_lea.sflag [#allocation4], %s225
        %s227 = sand.u32 %s41, 1
        %s228 = smul.addr %s227, 8
        %s229 = scalar_lea.vmem [#allocation3], %s228
        %p230 = pneg %p54
        %p231 = pneg %p51
        %p232 = pneg %p80
        %p233 = pneg %p77
        %p234 = pneg %p106
        %p235 = pneg %p103
        %p236 = pneg %p132
        %p237 = pneg %p129
        %s238 = sand.u32 %s119, 1
        %s239 = scalar_lea.sflag [#allocation5], %s238
        %s240 = sand.u32 %s119, 1
        %s241 = smul.addr %s240, 8
        %s242 = scalar_lea.vmem [#allocation9], %s241
        %s243 = smul.u32 4, %s26
        %s244 = smul.u32 32, %s26
        %p246 = scmp.eq.s32.totalorder %s26, 0
        // Predicated region
        $region45: #{granite_moe_shared_mlp.1} parent=31 // pred_check
          %p247 = pneg %p246
        $region46: #{granite_moe_shared_mlp.1} parent=31 // pred_check_branch
          %249 = sbr.rel (%p247) target = $region48
        $region47: #{granite_moe_shared_mlp.1} parent=31 // pred_region
          %250 = vst [vmem:[#allocation2] sm:$0xff] 0.0
        $region48: #{granite_moe_shared_mlp.1} parent=31 // pred_fallthru
          _
        %v251 = vld [vmem:[%s212] sm:$0xff]
        %v252 = vpack.c.bf16 %v251, %v251
        %v253 = vld [vmem:[#allocation6] sm:$0xff]
        %v254 = vld [vmem:[#allocation6 + $0x8] sm:$0xff]
        %v255 = vld [vmem:[#allocation6 + $0x10] sm:$0xff]
        %v256 = vld [vmem:[#allocation6 + $0x18] sm:$0xff]
        %v257 = vld [vmem:[#allocation6 + $0x20] sm:$0xff]
        %v258 = vld [vmem:[#allocation6 + $0x28] sm:$0xff]
        %v259 = vld [vmem:[#allocation6 + $0x30] sm:$0xff]
        %v260 = vld [vmem:[#allocation6 + $0x38] sm:$0xff]
        %v261 = vld [vmem:[#allocation6 + $0x40] sm:$0xff]
        %v262 = vld [vmem:[#allocation6 + $0x48] sm:$0xff]
        %v263 = vld [vmem:[#allocation6 + $0x50] sm:$0xff]
        %v264 = vld [vmem:[#allocation6 + $0x58] sm:$0xff]
        %v265 = vld [vmem:[#allocation6 + $0x60] sm:$0xff]
        %v266 = vld [vmem:[#allocation6 + $0x68] sm:$0xff]
        %v267 = vld [vmem:[#allocation6 + $0x70] sm:$0xff]
        %v268 = vld [vmem:[#allocation6 + $0x78] sm:$0xff]
        %v269 = vld [vmem:[#allocation6 + $0x80] sm:$0xff]
        %v270 = vld [vmem:[#allocation6 + $0x88] sm:$0xff]
        %v271 = vld [vmem:[#allocation6 + $0x90] sm:$0xff]
        %v272 = vld [vmem:[#allocation6 + $0x98] sm:$0xff]
        %v273 = vld [vmem:[#allocation6 + $0xa0] sm:$0xff]
        %v274 = vld [vmem:[#allocation6 + $0xa8] sm:$0xff]
        %v275 = vld [vmem:[#allocation6 + $0xb0] sm:$0xff]
        %v276 = vld [vmem:[#allocation6 + $0xb8] sm:$0xff]
        %v277 = vld [vmem:[#allocation6 + $0xc0] sm:$0xff]
        %v278 = vld [vmem:[#allocation6 + $0xc8] sm:$0xff]
        %v279 = vld [vmem:[#allocation6 + $0xd0] sm:$0xff]
        %v280 = vld [vmem:[#allocation6 + $0xd8] sm:$0xff]
        %v281 = vld [vmem:[#allocation6 + $0xe0] sm:$0xff]
        %v282 = vld [vmem:[#allocation6 + $0xe8] sm:$0xff]
        %v283 = vld [vmem:[#allocation6 + $0xf0] sm:$0xff]
        %v284 = vld [vmem:[#allocation6 + $0xf8] sm:$0xff]
        %v317 = vunpack.c.l.b16 %v253
        %v318 = vunpack.c.h.b16 %v253
        %v319 = vunpack.c.l.b16 %v254
        %v320 = vunpack.c.h.b16 %v254
        %v321 = vunpack.c.l.b16 %v255
        %v322 = vunpack.c.h.b16 %v255
        %v323 = vunpack.c.l.b16 %v256
        %v324 = vunpack.c.h.b16 %v256
        %v325 = vunpack.c.l.b16 %v257
        %v326 = vunpack.c.h.b16 %v257
        %v327 = vunpack.c.l.b16 %v258
        %v328 = vunpack.c.h.b16 %v258
        %v329 = vunpack.c.l.b16 %v259
        %v330 = vunpack.c.h.b16 %v259
        %v331 = vunpack.c.l.b16 %v260
        %v332 = vunpack.c.h.b16 %v260
        %v333 = vunpack.c.l.b16 %v261
        %v334 = vunpack.c.h.b16 %v261
        %v335 = vunpack.c.l.b16 %v262
        %v336 = vunpack.c.h.b16 %v262
        %v337 = vunpack.c.l.b16 %v263
        %v338 = vunpack.c.h.b16 %v263
        %v339 = vunpack.c.l.b16 %v264
        %v340 = vunpack.c.h.b16 %v264
        %v341 = vunpack.c.l.b16 %v265
        %v342 = vunpack.c.h.b16 %v265
        %v343 = vunpack.c.l.b16 %v266
        %v344 = vunpack.c.h.b16 %v266
        %v345 = vunpack.c.l.b16 %v267
        %v346 = vunpack.c.h.b16 %v267
        %v347 = vunpack.c.l.b16 %v268
        %v348 = vunpack.c.h.b16 %v268
        %v349 = vunpack.c.l.b16 %v269
        %v350 = vunpack.c.h.b16 %v269
        %v351 = vunpack.c.l.b16 %v270
        %v352 = vunpack.c.h.b16 %v270
        %v353 = vunpack.c.l.b16 %v271
        %v354 = vunpack.c.h.b16 %v271
        %v355 = vunpack.c.l.b16 %v272
        %v356 = vunpack.c.h.b16 %v272
        %v357 = vunpack.c.l.b16 %v273
        %v358 = vunpack.c.h.b16 %v273
        %v359 = vunpack.c.l.b16 %v274
        %v360 = vunpack.c.h.b16 %v274
        %v361 = vunpack.c.l.b16 %v275
        %v362 = vunpack.c.h.b16 %v275
        %v363 = vunpack.c.l.b16 %v276
        %v364 = vunpack.c.h.b16 %v276
        %v365 = vunpack.c.l.b16 %v277
        %v366 = vunpack.c.h.b16 %v277
        %v367 = vunpack.c.l.b16 %v278
        %v368 = vunpack.c.h.b16 %v278
        %v369 = vunpack.c.l.b16 %v279
        %v370 = vunpack.c.h.b16 %v279
        %v371 = vunpack.c.l.b16 %v280
        %v372 = vunpack.c.h.b16 %v280
        %v373 = vunpack.c.l.b16 %v281
        %v374 = vunpack.c.h.b16 %v281
        %v375 = vunpack.c.l.b16 %v282
        %v376 = vunpack.c.h.b16 %v282
        %v377 = vunpack.c.l.b16 %v283
        %v378 = vunpack.c.h.b16 %v283
        %v379 = vunpack.c.l.b16 %v284
        %v380 = vunpack.c.h.b16 %v284
        %v381 = vpack.c.b16 %v321, %v317
        %v382 = vpack.c.b16 %v322, %v318
        %v383 = vpack.c.b16 %v323, %v319
        %v384 = vpack.c.b16 %v324, %v320
        %v385 = vpack.c.b16 %v329, %v325
        %v386 = vpack.c.b16 %v330, %v326
        %v387 = vpack.c.b16 %v331, %v327
        %v388 = vpack.c.b16 %v332, %v328
        %v389 = vpack.c.b16 %v337, %v333
        %v390 = vpack.c.b16 %v338, %v334
        %v391 = vpack.c.b16 %v339, %v335
        %v392 = vpack.c.b16 %v340, %v336
        %v393 = vpack.c.b16 %v345, %v341
        %v394 = vpack.c.b16 %v346, %v342
        %v395 = vpack.c.b16 %v347, %v343
        %v396 = vpack.c.b16 %v348, %v344
        %v397 = vpack.c.b16 %v353, %v349
        %v398 = vpack.c.b16 %v354, %v350
        %v399 = vpack.c.b16 %v355, %v351
        %v400 = vpack.c.b16 %v356, %v352
        %v401 = vpack.c.b16 %v361, %v357
        %v402 = vpack.c.b16 %v362, %v358
        %v403 = vpack.c.b16 %v363, %v359
        %v404 = vpack.c.b16 %v364, %v360
        %v405 = vpack.c.b16 %v369, %v365
        %v406 = vpack.c.b16 %v370, %v366
        %v407 = vpack.c.b16 %v371, %v367
        %v408 = vpack.c.b16 %v372, %v368
        %v409 = vpack.c.b16 %v377, %v373
        %v410 = vpack.c.b16 %v378, %v374
        %v411 = vpack.c.b16 %v379, %v375
        %v412 = vpack.c.b16 %v380, %v376
        %445 = vmatprep.subr.bf16.mxu0 %v410
        %446 = vmatpush1.bf16.msra.mxu0 %v409
        %447 = vmatprep.subr.bf16.mxu0 %v406
        %448 = vmatpush1.bf16.msra.mxu0 %v405
        %449 = vmatprep.subr.bf16.mxu0 %v402
        %450 = vmatpush1.bf16.msra.mxu0 %v401
        %451 = vmatprep.subr.bf16.mxu0 %v398
        %452 = vmatpush1.bf16.msra.mxu0 %v397
        %453 = vmatprep.subr.bf16.mxu0 %v394
        %454 = vmatpush1.bf16.msra.mxu0 %v393
        %455 = vmatprep.subr.bf16.mxu0 %v390
        %456 = vmatpush1.bf16.msra.mxu0 %v389
        %457 = vmatprep.subr.bf16.mxu0 %v386
        %458 = vmatpush1.bf16.msra.mxu0 %v385
        %459 = vmatprep.subr.bf16.mxu0 %v382
        %460 = vmatpush1.bf16.msra.mxu0 %v381
        %461 = vmatprep.subr.bf16.mxu0 0
        %462 = vmatpush2.bf16.msra.mxu0 0
        %463 = vmatprep.subr.bf16.mxu0 0
        %464 = vmatpush2.bf16.msra.mxu0 0
        %465 = vmatprep.subr.bf16.mxu0 0
        %466 = vmatpush2.bf16.msra.mxu0 0
        %467 = vmatprep.subr.bf16.mxu0 0
        %468 = vmatpush2.bf16.msra.mxu0 0
        %469 = vmatprep.subr.bf16.mxu0 0
        %470 = vmatpush2.bf16.msra.mxu0 0
        %471 = vmatprep.subr.bf16.mxu0 0
        %472 = vmatpush2.bf16.msra.mxu0 0
        %473 = vmatprep.subr.bf16.mxu0 0
        %474 = vmatpush2.bf16.msra.mxu0 0
        %475 = vmatprep.subr.bf16.mxu0 0
        %476 = vmatpush2.bf16.msra.mxu0 0
        %477 = vmatprep.mubr.bf16.mxu0 0
        %478 = vmatmul.mubr.bf16.gmra.mxu0 %v252
        %v479 = vpop.f32.mrf.mxu0
        %v480 = vadd.f32 0.0, %v479
        %v481 = vpop.f32.mrf.mxu0
        %v482 = vadd.f32 0.0, %v481
        %v483 = vpop.f32.mrf.mxu0
        %v484 = vpop.f32.mrf.mxu0
        %485 = vdwg.mxu0
        %486 = vmatprep.subr.bf16.mxu0 %v412
        %487 = vmatpush1.bf16.msra.mxu0 %v411
        %488 = vmatprep.subr.bf16.mxu0 %v408
        %489 = vmatpush1.bf16.msra.mxu0 %v407
        %490 = vmatprep.subr.bf16.mxu0 %v404
        %491 = vmatpush1.bf16.msra.mxu0 %v403
        %492 = vmatprep.subr.bf16.mxu0 %v400
        %493 = vmatpush1.bf16.msra.mxu0 %v399
        %494 = vmatprep.subr.bf16.mxu0 %v396
        %495 = vmatpush1.bf16.msra.mxu0 %v395
        %496 = vmatprep.subr.bf16.mxu0 %v392
        %497 = vmatpush1.bf16.msra.mxu0 %v391
        %498 = vmatprep.subr.bf16.mxu0 %v388
        %499 = vmatpush1.bf16.msra.mxu0 %v387
        %500 = vmatprep.subr.bf16.mxu0 %v384
        %501 = vmatpush1.bf16.msra.mxu0 %v383
        %502 = vmatprep.subr.bf16.mxu0 0
        %503 = vmatpush2.bf16.msra.mxu0 0
        %504 = vmatprep.subr.bf16.mxu0 0
        %505 = vmatpush2.bf16.msra.mxu0 0
        %506 = vmatprep.subr.bf16.mxu0 0
        %507 = vmatpush2.bf16.msra.mxu0 0
        %508 = vmatprep.subr.bf16.mxu0 0
        %509 = vmatpush2.bf16.msra.mxu0 0
        %510 = vmatprep.subr.bf16.mxu0 0
        %511 = vmatpush2.bf16.msra.mxu0 0
        %512 = vmatprep.subr.bf16.mxu0 0
        %513 = vmatpush2.bf16.msra.mxu0 0
        %514 = vmatprep.subr.bf16.mxu0 0
        %515 = vmatpush2.bf16.msra.mxu0 0
        %516 = vmatprep.subr.bf16.mxu0 0
        %517 = vmatpush2.bf16.msra.mxu0 0
        %518 = vmatprep.mubr.bf16.mxu0 0
        %519 = vmatmul.mubr.bf16.gmra.mxu0 %v252
        %v520 = vpop.f32.mrf.mxu0
        %v521 = vadd.f32 0.0, %v520
        %v522 = vpop.f32.mrf.mxu0
        %v523 = vadd.f32 0.0, %v522
        %v524 = vpop.f32.mrf.mxu0
        %v525 = vpop.f32.mrf.mxu0
        %526 = vdwg.mxu0
        %v527 = vxor.u32 %v480, 2147483648
        %v528 = vxor.u32 %v482, 2147483648
        %v529 = vmul.f32 %v527, 1.442695
        %v530 = vpow.pop %v529
        %v531 = vmul.f32 %v528, 1.442695
        %v532 = vpow.pop %v531
        %v533 = vadd.f32 %v530, 1.0
        %v534 = vadd.f32 %v532, 1.0
        %v535 = vrcp.pop %v533
        %v536 = vmul.f32 1.0, %v535
        %v537 = vrcp.pop %v534
        %v538 = vmul.f32 1.0, %v537
        %v539 = vmul.f32 %v480, %v536
        %v540 = vmul.f32 %v482, %v538
        %v541 = vmul.f32 %v539, %v521
        %v542 = vmul.f32 %v540, %v523
        %v543 = vpack.c.bf16 %v541, %v541
        %v544 = vpack.c.bf16 %v542, %v542
        %v545 = vld [vmem:[#allocation2] sm:$0xff]
        %v546 = vld [vmem:[#allocation8] sm:$0xf]
        %v547 = vld [vmem:[#allocation8 + $0x4] sm:$0xf]
        %v548 = vld [vmem:[#allocation8 + $0x8] sm:$0xf]
        %v549 = vld [vmem:[#allocation8 + $0xc] sm:$0xf]
        %v550 = vld [vmem:[#allocation8 + $0x10] sm:$0xf]
        %v551 = vld [vmem:[#allocation8 + $0x14] sm:$0xf]
        %v552 = vld [vmem:[#allocation8 + $0x18] sm:$0xf]
        %v553 = vld [vmem:[#allocation8 + $0x1c] sm:$0xf]
        %v554 = vld [vmem:[#allocation8 + $0x20] sm:$0xf]
        %v555 = vld [vmem:[#allocation8 + $0x24] sm:$0xf]
        %v556 = vld [vmem:[#allocation8 + $0x28] sm:$0xf]
        %v557 = vld [vmem:[#allocation8 + $0x2c] sm:$0xf]
        %v558 = vld [vmem:[#allocation8 + $0x30] sm:$0xf]
        %v559 = vld [vmem:[#allocation8 + $0x34] sm:$0xf]
        %v560 = vld [vmem:[#allocation8 + $0x38] sm:$0xf]
        %v561 = vld [vmem:[#allocation8 + $0x3c] sm:$0xf]
        %v562 = vld [vmem:[#allocation8 + $0x40] sm:$0xf]
        %v563 = vld [vmem:[#allocation8 + $0x44] sm:$0xf]
        %v564 = vld [vmem:[#allocation8 + $0x48] sm:$0xf]
        %v565 = vld [vmem:[#allocation8 + $0x4c] sm:$0xf]
        %v566 = vld [vmem:[#allocation8 + $0x50] sm:$0xf]
        %v567 = vld [vmem:[#allocation8 + $0x54] sm:$0xf]
        %v568 = vld [vmem:[#allocation8 + $0x58] sm:$0xf]
        %v569 = vld [vmem:[#allocation8 + $0x5c] sm:$0xf]
        %v570 = vld [vmem:[#allocation8 + $0x60] sm:$0xf]
        %v571 = vld [vmem:[#allocation8 + $0x64] sm:$0xf]
        %v572 = vld [vmem:[#allocation8 + $0x68] sm:$0xf]
        %v573 = vld [vmem:[#allocation8 + $0x6c] sm:$0xf]
        %v574 = vld [vmem:[#allocation8 + $0x70] sm:$0xf]
        %v575 = vld [vmem:[#allocation8 + $0x74] sm:$0xf]
        %v576 = vld [vmem:[#allocation8 + $0x78] sm:$0xf]
        %v577 = vld [vmem:[#allocation8 + $0x7c] sm:$0xf]
        %v610 = vunpack.c.l.b16 %v546
        %v611 = vunpack.c.l.b16 %v547
        %v612 = vunpack.c.l.b16 %v548
        %v613 = vunpack.c.l.b16 %v549
        %v614 = vunpack.c.l.b16 %v550
        %v615 = vunpack.c.l.b16 %v551
        %v616 = vunpack.c.l.b16 %v552
        %v617 = vunpack.c.l.b16 %v553
        %v618 = vunpack.c.l.b16 %v554
        %v619 = vunpack.c.l.b16 %v555
        %v620 = vunpack.c.l.b16 %v556
        %v621 = vunpack.c.l.b16 %v557
        %v622 = vunpack.c.l.b16 %v558
        %v623 = vunpack.c.l.b16 %v559
        %v624 = vunpack.c.l.b16 %v560
        %v625 = vunpack.c.l.b16 %v561
        %v626 = vunpack.c.l.b16 %v562
        %v627 = vunpack.c.l.b16 %v563
        %v628 = vunpack.c.l.b16 %v564
        %v629 = vunpack.c.l.b16 %v565
        %v630 = vunpack.c.l.b16 %v566
        %v631 = vunpack.c.l.b16 %v567
        %v632 = vunpack.c.l.b16 %v568
        %v633 = vunpack.c.l.b16 %v569
        %v634 = vunpack.c.l.b16 %v570
        %v635 = vunpack.c.l.b16 %v571
        %v636 = vunpack.c.l.b16 %v572
        %v637 = vunpack.c.l.b16 %v573
        %v638 = vunpack.c.l.b16 %v574
        %v639 = vunpack.c.l.b16 %v575
        %v640 = vunpack.c.l.b16 %v576
        %v641 = vunpack.c.l.b16 %v577
        %v642 = vpack.c.b16 %v611, %v610
        %v643 = vpack.c.b16 %v613, %v612
        %v644 = vpack.c.b16 %v615, %v614
        %v645 = vpack.c.b16 %v617, %v616
        %v646 = vpack.c.b16 %v619, %v618
        %v647 = vpack.c.b16 %v621, %v620
        %v648 = vpack.c.b16 %v623, %v622
        %v649 = vpack.c.b16 %v625, %v624
        %v650 = vpack.c.b16 %v627, %v626
        %v651 = vpack.c.b16 %v629, %v628
        %v652 = vpack.c.b16 %v631, %v630
        %v653 = vpack.c.b16 %v633, %v632
        %v654 = vpack.c.b16 %v635, %v634
        %v655 = vpack.c.b16 %v637, %v636
        %v656 = vpack.c.b16 %v639, %v638
        %v657 = vpack.c.b16 %v641, %v640
        %674 = vmatprep.subr.bf16.mxu0 0
        %675 = vmatpush1.bf16.msra.mxu0 %v649
        %676 = vmatprep.subr.bf16.mxu0 0
        %677 = vmatpush1.bf16.msra.mxu0 %v648
        %678 = vmatprep.subr.bf16.mxu0 0
        %679 = vmatpush1.bf16.msra.mxu0 %v647
        %680 = vmatprep.subr.bf16.mxu0 0
        %681 = vmatpush1.bf16.msra.mxu0 %v646
        %682 = vmatprep.subr.bf16.mxu0 0
        %683 = vmatpush1.bf16.msra.mxu0 %v645
        %684 = vmatprep.subr.bf16.mxu0 0
        %685 = vmatpush1.bf16.msra.mxu0 %v644
        %686 = vmatprep.subr.bf16.mxu0 0
        %687 = vmatpush1.bf16.msra.mxu0 %v643
        %688 = vmatprep.subr.bf16.mxu0 0
        %689 = vmatpush1.bf16.msra.mxu0 %v642
        %690 = vmatprep.subr.bf16.mxu0 0
        %691 = vmatpush2.bf16.msra.mxu0 %v657
        %692 = vmatprep.subr.bf16.mxu0 0
        %693 = vmatpush2.bf16.msra.mxu0 %v656
        %694 = vmatprep.subr.bf16.mxu0 0
        %695 = vmatpush2.bf16.msra.mxu0 %v655
        %696 = vmatprep.subr.bf16.mxu0 0
        %697 = vmatpush2.bf16.msra.mxu0 %v654
        %698 = vmatprep.subr.bf16.mxu0 0
        %699 = vmatpush2.bf16.msra.mxu0 %v653
        %700 = vmatprep.subr.bf16.mxu0 0
        %701 = vmatpush2.bf16.msra.mxu0 %v652
        %702 = vmatprep.subr.bf16.mxu0 0
        %703 = vmatpush2.bf16.msra.mxu0 %v651
        %704 = vmatprep.subr.bf16.mxu0 0
        %705 = vmatpush2.bf16.msra.mxu0 %v650
        %706 = vmatprep.mubr.bf16.mxu0 %v544
        %707 = vmatmul.mubr.bf16.gmra.mxu0 %v543
        %v708 = vpop.f32.mrf.mxu0
        %v709 = vadd.f32 0.0, %v708
        %v710 = vpop.f32.mrf.mxu0
        %v711 = vpop.f32.mrf.mxu0
        %v712 = vpop.f32.mrf.mxu0
        %713 = vdwg.mxu0
        %v714 = vadd.f32 %v545, %v709
        %715 = vst [vmem:[#allocation2] sm:$0xff] %v714
        // Predicated region
        $region49: #{granite_moe_shared_mlp.1} parent=31 // pred_check
          %p716 = pneg %p246
        $region50: #{granite_moe_shared_mlp.1} parent=31 // pred_check_branch
          %718 = sbr.rel (%p716) target = $region52
        $region51: #{granite_moe_shared_mlp.1} parent=31 // pred_region
          %v719 = vld [vmem:[#allocation2] sm:$0xff]
          %720 = vst [vmem:[%s242] sm:$0xff] %v719
        $region52: #{granite_moe_shared_mlp.1} parent=31 // pred_fallthru
          _
        %s721 = sand.u32 %s119, 1
        %s722 = scalar_lea.sflag [#allocation5], %s721
        %s723 = sand.u32 %s119, 1
        %s724 = smul.addr %s723, 8
        %s725 = scalar_lea.vmem [#allocation9], %s724
        // Predicated region
        $region53: #{granite_moe_shared_mlp.1} parent=31 // pred_check
          %p726 = pneg %p129
        $region54: #{granite_moe_shared_mlp.1} parent=31 // pred_check_branch
          %728 = sbr.rel (%p726) target = $region56
        $region55: #{granite_moe_shared_mlp.1} parent=31 // pred_region
          %s730 = ssub.s32 128, 128
          %731 = vsyncadd %s722, %s730
          %s732 = smul.addr %s25, 128
          %s733 = scalar_lea.hbm %s3, %s732
          %s735 = sshll.u32 %s725, 4
          %s736 = int_to_ptr.vmem [resolvable:$true] %s735
          %738 = dma.vmem_to_hbm [thread:$0]  %s736, 128, %s733, %s722
        $region56: #{granite_moe_shared_mlp.1} parent=31 // pred_fallthru
          _
      $region32: #{granite_moe_shared_mlp.1} parent=5 // pred_fallthru
        _
      %p739 = scmp.le.s32.totalorder 2, %s16
      // Predicated region
      $region57: #{granite_moe_shared_mlp.1} parent=5 // pred_check
        %p740 = pneg %p739
      $region58: #{granite_moe_shared_mlp.1} parent=5 // pred_check_branch
        %742 = sbr.rel (%p740) target = $region60
      $region59: #{granite_moe_shared_mlp.1} parent=5 // pred_region
        %s743 = ssub.s32 %s16, 2
        // Predicated region
        $region61: #{granite_moe_shared_mlp.1} parent=59 // pred_check
          %p744 = pneg %p135
        $region62: #{granite_moe_shared_mlp.1} parent=59 // pred_check_branch
          %746 = sbr.rel (%p744) target = $region64
        $region63: #{granite_moe_shared_mlp.1} parent=59 // pred_region
          %s747 = sand.u32 %s120, 1
          %s748 = scalar_lea.sflag [#allocation5], %s747
          %s749 = sand.u32 %s120, 1
          %s750 = smul.addr %s749, 8
          %s751 = scalar_lea.vmem [#allocation9], %s750
          %752 = dma.done %s748, 128
        $region64: #{granite_moe_shared_mlp.1} parent=59 // pred_fallthru
          _
      $region60: #{granite_moe_shared_mlp.1} parent=5 // pred_fallthru
        _
    $region6: #{granite_moe_shared_mlp.1} parent=1 // loop_footer
      %s20 = sadd.s32 1, %s16
    $region7: #{granite_moe_shared_mlp.1} parent=1 // loop_footer_branch
      %15 = sbr.rel target = $region3
    $region8: #{granite_moe_shared_mlp.1} parent=1 // loop_exit
      _
    %753 = vsyncpa [#allocation4], 1
    %s754 = scalar_lea.sflag [#allocation4], 1
    %755 = vsyncpa %s754, 1
    %756 = vsyncpa [#allocation7], 1
    %757 = vsyncpa [#allocation5], 1
    %s758 = scalar_lea.sflag [#allocation5], 1
    %759 = vsyncpa %s758, 1

</llo_original>
